<compile_context>
chip_gen: v6e
topology: v6e:2x2x1
jax: 0.10.0
libtpu: 0.0.40
codegen_flags: <defaults>
</compile_context>

<pallas_src>
import functools

import jax
import jax.numpy as jnp
from jax.experimental import pallas as pl
from jax.experimental.pallas import tpu as pltpu


_DEFAULT_TILE_L = 2048  # lane-dense L tile target (sweepable, multiple of 128)


def _vmem_capacity_bytes():
    """Physical per-core VMEM; conservative (v7x) fallback if the query fails."""
    try:
        info = pltpu.get_tpu_info()
        for name in ("vmem_capacity_bytes", "vmem_size_bytes", "vmem_bytes"):
            cap = getattr(info, name, None)
            if cap:
                return int(cap)
    except Exception:
        pass
    return 64 * 1024 * 1024


def _is_v5e_like():
    """v5e has no bf16 VALU: keep tap construction in the input dtype there."""
    try:
        kind = jax.devices()[0].device_kind.lower()
        return ("v5 lite" in kind) or ("v5e" in kind) or ("v5litepod" in kind)
    except Exception:
        return False


def _vmem_estimate(c_in, c_out, tile_l, halo_w, x_isz, out_isz, comp_isz):
    """Rough scoped-VMEM bytes: double-buffered blocks + in-kernel temporaries."""
    blocks = (2 * c_in * tile_l * x_isz            # center x (double-buffered)
              + 2 * 2 * c_in * halo_w * x_isz      # left/right halos (double-buffered)
              + 2 * c_out * tile_l * out_isz       # output (double-buffered)
              + c_out * 3 * c_in * comp_isz        # resident weight
              + c_out * 4)                         # bias
    temps = (3 * c_in * tile_l * comp_isz                     # im2col rhs / cast taps
             + 3 * c_in * tile_l * max(x_isz, comp_isz)       # tap/roll temporaries
             + c_out * tile_l * 4)                            # f32 accumulator
    return blocks + temps


def _dilated_conv_relu_kernel(xc_ref, xl_ref, xr_ref, w_ref, b_ref, o_ref, *,
                              dilation, tile_l, halo_w, length, num_l_tiles,
                              compute_dtype, late_cast, fuse_taps):
    """One (batch, L-tile) grid point.

    xc_ref: (C_in, tile_l)   center tile, columns [j*TL, j*TL + TL)
    xl_ref: (C_in, halo_w)   columns [j*TL - HW, j*TL)        (valid when j > 0)
    xr_ref: (C_in, halo_w)   columns [(j+1)*TL, (j+1)*TL+HW)  (valid when j < J-1)
    w_ref : (C_out, 3*C_in)  tap-major im2col weight          (fuse_taps=True)
            (3, C_out, C_in) per-tap weight                   (fuse_taps=False)
    b_ref : (C_out, 1)       bias (f32)
    o_ref : (C_out, tile_l)  output tile
    """
    d = dilation
    tl = tile_l
    hw = halo_w
    j = pl.program_id(1)

    # On v5e the VALU has no bf16 path, so keep roll/select work in the input
    # dtype and cast only the MXU operands (late_cast=True).  On v6e/v7x cast
    # up-front: bf16 tap construction halves vreg/vst pressure.
    tap_dt = xc_ref.dtype if late_cast else compute_dtype

    xc = xc_ref[...].astype(tap_dt)
    xl = xl_ref[...].astype(tap_dt)
    xr = xr_ref[...].astype(tap_dt)
    c_in = xc.shape[0]

    zero_hw = jnp.zeros((c_in, hw), dtype=tap_dt)
    col_hw = jax.lax.broadcasted_iota(jnp.int32, (c_in, hw), 1)

    if length % tl != 0:
        # Ragged last tile (trace-time gated): zero columns beyond `length` so
        # partial-block garbage cannot leak into valid outputs through +d tap.
        col_tl = jax.lax.broadcasted_iota(jnp.int32, (1, tl), 1)
        xc = jnp.where(j * tl + col_tl < length, xc, jnp.zeros_like(xc))
        xr = jnp.where((j + 1) * tl + col_hw < length, xr, zero_hw)

    # ---- tap 0: x[:, t - d]  (rolls run on the XLU; slices below are static)
    rc0 = pltpu.roll(xc, shift=d % tl, axis=1)        # rc0[:, t] == xc[:, t-d]    for t >= d
    rl0 = pltpu.roll(xl, shift=d % hw, axis=1)        # rl0[:, t] == xl[:, hw-d+t] for t <  d
    left_halo = jnp.where(j > 0, rl0, zero_hw)        # zero-pad at sequence start
    left_fix = jnp.where(col_hw < d, left_halo, rc0[:, :hw])
    tap0 = (jnp.concatenate([left_fix, rc0[:, hw:]], axis=1) if tl > hw
            else left_fix)

    # ---- tap 2: x[:, t + d]
    rc2 = pltpu.roll(xc, shift=(tl - d) % tl, axis=1)  # rc2[:, t] == xc[:, t+d]     for t < tl-d
    rr2 = pltpu.roll(xr, shift=(hw - d) % hw, axis=1)  # rr2[:, t] == xr[:, t+d-hw]  for t >= hw-d
    right_halo = jnp.where(j + 1 < num_l_tiles, rr2, zero_hw)  # zero-pad at end
    right_fix = jnp.where(col_hw >= hw - d, right_halo, rc2[:, tl - hw:])
    tap2 = (jnp.concatenate([rc2[:, :tl - hw], right_fix], axis=1) if tl > hw
            else right_fix)

    # ---- MXU matmul(s), f32 accumulation ------------------------------------
    if fuse_taps:
        # Fused im2col: (C_out, 3*C_in) @ (3*C_in, TL).  C_in is sublane-aligned
        # so the axis-0 concat needs no cross-sublane relayout.
        rhs = jnp.concatenate([tap0, xc, tap2], axis=0).astype(compute_dtype)
        acc = jnp.dot(w_ref[...], rhs, preferred_element_type=jnp.float32)
    else:
        # Sublane-unaligned C_in: three accumulating matmuls, no axis-0 concat.
        acc = jnp.dot(w_ref[0], tap0.astype(compute_dtype),
                      preferred_element_type=jnp.float32)
        acc = acc + jnp.dot(w_ref[1], xc.astype(compute_dtype),
                            preferred_element_type=jnp.float32)
        acc = acc + jnp.dot(w_ref[2], tap2.astype(compute_dtype),
                            preferred_element_type=jnp.float32)

    acc = acc + b_ref[...]                             # (C_out, 1) broadcast
    o_ref[...] = jnp.maximum(acc, 0.0).astype(o_ref.dtype)


def dilated_conv_relu(x, weight, bias, *, dilation=1, tile_l=None,
                      compute_dtype=jnp.bfloat16, out_dtype=None):
    """relu(conv1d(x)) with kernel_size=3, padding=dilation, dilation=dilation.

    x: (B, C_in, L); weight: (C_out, C_in, 3); bias: (C_out,).
    Pass bf16 `x` / `out_dtype=jnp.bfloat16` to halve HBM traffic (the kernel
    is HBM-roofline bound for typical channel counts).
    """
    b, c_in, length = x.shape
    c_out, c_in_w, ksize = weight.shape
    assert ksize == 3 and c_in_w == c_in, (weight.shape, c_in)
    out_dtype = x.dtype if out_dtype is None else out_dtype

    x_isz = jnp.dtype(x.dtype).itemsize
    out_isz = jnp.dtype(out_dtype).itemsize
    comp_isz = jnp.dtype(compute_dtype).itemsize

    # ---- generation-aware VMEM budget (~48 MiB v7x, ~96 MiB v5e/v6e) -------
    vmem_budget = int(0.75 * _vmem_capacity_bytes())

    # ---- tile selection: lane-dense L tiles, bounded VMEM ------------------
    auto_tile = tile_l is None
    if auto_tile:
        tile_l = _DEFAULT_TILE_L
    tile_l = min(tile_l, length)
    if tile_l != length and tile_l % 128 != 0:
        raise ValueError("tile_l must be a multiple of 128 (or equal to L)")
    if auto_tile:
        # Shrink until blocks + in-kernel temporaries fit the VMEM budget.
        while (tile_l != length and tile_l > 256 and
               _vmem_estimate(c_in, c_out, tile_l, min(128, tile_l),
                              x_isz, out_isz, comp_isz) > vmem_budget):
            tile_l //= 2
        # Keep >= 2 grid points so both v7x TensorCores get work.
        if b * pl.cdiv(length, tile_l) < 2 and length >= 256:
            tile_l = min(tile_l, ((length + 1) // 2 + 127) // 128 * 128)

    halo_w = min(128, tile_l)
    if dilation > halo_w:
        # TODO(synk): dilation > min(128, L) would need wider halo blocks.
        raise NotImplementedError("dilation > min(128, L) is not supported")

    num_l_tiles = pl.cdiv(length, tile_l)
    num_halo_blocks = pl.cdiv(length, halo_w)
    tpb = tile_l // halo_w  # halo-width blocks per L-tile (exact whenever J > 1)

    # ---- weight layout ------------------------------------------------------
    late_cast = _is_v5e_like() and jnp.dtype(x.dtype) != jnp.dtype(compute_dtype)
    concat_dtype = jnp.dtype(x.dtype) if late_cast else jnp.dtype(compute_dtype)
    sublane_pack = 8 * max(1, 4 // concat_dtype.itemsize)   # 8 f32, 16 bf16
    fuse_taps = (c_in % sublane_pack == 0)

    if fuse_taps:
        # tap-major im2col weight: rows of rhs are [tap0; center; tap2].
        w_arg = (jnp.transpose(weight, (0, 2, 1))
                 .reshape(c_out, 3 * c_in).astype(compute_dtype))
        w_spec = pl.BlockSpec((c_out, 3 * c_in), lambda bi, j: (0, 0))
    else:
        w_arg = jnp.transpose(weight, (2, 0, 1)).astype(compute_dtype)  # (3,Co,Ci)
        w_spec = pl.BlockSpec((3, c_out, c_in), lambda bi, j: (0, 0, 0))
    b_col = bias.reshape(c_out, 1).astype(jnp.float32)

    kernel = functools.partial(
        _dilated_conv_relu_kernel,
        dilation=dilation, tile_l=tile_l, halo_w=halo_w, length=length,
        num_l_tiles=num_l_tiles, compute_dtype=compute_dtype,
        late_cast=late_cast, fuse_taps=fuse_taps)

    in_specs = [
        # center tile of x
        pl.BlockSpec((pl.Squeezed(), c_in, tile_l),
                     lambda bi, j: (bi, 0, j)),
        # left neighbor chunk (halo_w wide), clamped at the sequence start
        pl.BlockSpec((pl.Squeezed(), c_in, halo_w),
                     lambda bi, j: (bi, 0, jnp.maximum(j * tpb - 1, 0))),
        # right neighbor chunk (halo_w wide), clamped at the sequence end
        pl.BlockSpec((pl.Squeezed(), c_in, halo_w),
                     lambda bi, j: (bi, 0, jnp.minimum((j + 1) * tpb,
                                                       num_halo_blocks - 1))),
        # weight & bias stay resident in VMEM across all grid steps
        w_spec,
        pl.BlockSpec((c_out, 1), lambda bi, j: (0, 0)),
    ]
    out_specs = pl.BlockSpec((pl.Squeezed(), c_out, tile_l),
                             lambda bi, j: (bi, 0, j))

    estimate = _vmem_estimate(c_in, c_out, tile_l, halo_w, x_isz, out_isz, comp_isz)
    vmem_limit = int(min(vmem_budget, max(32 * 1024 * 1024, int(1.5 * estimate))))

    cost = pl.CostEstimate(
        flops=2 * b * c_out * 3 * c_in * length,
        transcendentals=0,
        bytes_accessed=int(
            b * c_in * length * x_isz                           # center x read
            + b * num_l_tiles * 2 * c_in * halo_w * x_isz       # halo re-reads
            + w_arg.size * comp_isz + c_out * 4                 # weights + bias
            + b * c_out * length * out_isz))                    # output write

    return pl.pallas_call(
        kernel,
        out_shape=jax.ShapeDtypeStruct((b, c_out, length), out_dtype),
        grid_spec=pltpu.PrefetchScalarGridSpec(
            num_scalar_prefetch=0,
            grid=(b, num_l_tiles),
            in_specs=in_specs,
            out_specs=out_specs),
        compiler_params=pltpu.CompilerParams(
            dimension_semantics=("parallel", "parallel"),
            vmem_limit_bytes=vmem_limit),
        cost_estimate=cost,
    )(x, x, x, w_arg, b_col)


def _reference(x, weight, bias, *, dilation, compute_dtype=jnp.float32):
    """Pure-JAX reference (optionally with the same reduced-precision inputs)."""
    xc = x.astype(compute_dtype)
    wc = weight.astype(compute_dtype)
    y = jax.lax.conv_general_dilated(
        xc, wc,
        window_strides=(1,),
        padding=[(dilation, dilation)],
        rhs_dilation=(dilation,),
        dimension_numbers=("NCH", "OIH", "NCH"),
        preferred_element_type=jnp.float32)
    return jnp.maximum(y + bias.reshape(1, -1, 1), 0.0).astype(x.dtype)


def _init_params(key, c_in, c_out):
    # nn.Conv1d default init: uniform(+/- 1/sqrt(fan_in)), fan_in = c_in * 3.
    kw, kb = jax.random.split(key)
    bound = 1.0 / ((c_in * 3) ** 0.5)
    w = jax.random.uniform(kw, (c_out, c_in, 3), jnp.float32, -bound, bound)
    bb = jax.random.uniform(kb, (c_out,), jnp.float32, -bound, bound)
    return w, bb


if __name__ == "__main__":
    key = jax.random.PRNGKey(0)
    k1, k2, k3, k4 = jax.random.split(key, 4)

    # --- 1) module-sized small test, f32 compute (3-dot path, C_in=4) ------
    B, C_IN, C_OUT, L, DIL = 2, 4, 8, 16, 2
    x = jax.random.normal(k1, (B, C_IN, L), jnp.float32)
    w, bb = _init_params(k2, C_IN, C_OUT)

    y = jax.block_until_ready(
        dilated_conv_relu(x, w, bb, dilation=DIL, compute_dtype=jnp.float32))
    y_ref = _reference(x, w, bb, dilation=DIL, compute_dtype=jnp.float32)
    assert y.shape == (B, C_OUT, L), y.shape
    assert jnp.allclose(y, y_ref, atol=5e-2, rtol=5e-2), "f32 path mismatch"

    # --- 2) same shapes, default bf16 MXU path ------------------------------
    y_bf = jax.block_until_ready(dilated_conv_relu(x, w, bb, dilation=DIL))
    y_ref_bf = _reference(x, w, bb, dilation=DIL, compute_dtype=jnp.bfloat16)
    assert jnp.allclose(y_bf, y_ref_bf, atol=2e-2, rtol=2e-2), "bf16 path mismatch"

    # --- 3) bf16 input & output (halved HBM bytes) --------------------------
    x_bf = x.astype(jnp.bfloat16)
    y_bf_io = jax.block_until_ready(dilated_conv_relu(x_bf, w, bb, dilation=DIL))
    y_ref_bf_io = _reference(x_bf, w, bb, dilation=DIL, compute_dtype=jnp.bfloat16)
    assert y_bf_io.dtype == jnp.bfloat16
    assert jnp.allclose(y_bf_io.astype(jnp.float32),
                        y_ref_bf_io.astype(jnp.float32),
                        atol=5e-2, rtol=5e-2), "bf16 I/O path mismatch"

    # --- 4) multi-tile + ragged last tile + cross-tile halo (fused path) ----
    B2, C_IN2, C_OUT2, L2, DIL2 = 2, 8, 16, 300, 3
    x2 = jax.random.normal(k3, (B2, C_IN2, L2), jnp.float32)
    w2, bb2 = _init_params(k4, C_IN2, C_OUT2)

    y_tiled = jax.block_until_ready(
        dilated_conv_relu(x2, w2, bb2, dilation=DIL2, tile_l=128,
                          compute_dtype=jnp.float32))
    y_auto = jax.block_until_ready(
        dilated_conv_relu(x2, w2, bb2, dilation=DIL2,
                          compute_dtype=jnp.float32))   # auto tile: single tile
    y_ref2 = _reference(x2, w2, bb2, dilation=DIL2, compute_dtype=jnp.float32)
    # Tiled vs auto: identical math, sharp check of the halo logic.
    assert jnp.allclose(y_tiled, y_auto, atol=1e-5, rtol=1e-5), "halo/tiling mismatch"
    assert jnp.allclose(y_tiled, y_ref2, atol=5e-2, rtol=5e-2), "conv semantics mismatch"

    # --- 5) B == 1: auto L-split (keeps both v7x TensorCores busy) ----------
    y_b1 = jax.block_until_ready(
        dilated_conv_relu(x2[:1], w2, bb2, dilation=DIL2,
                          compute_dtype=jnp.float32))
    assert jnp.allclose(y_b1, y_ref2[:1], atol=5e-2, rtol=5e-2), "B=1 split mismatch"

    print("KERNEL_OK")
</pallas_src>

<mosaic_0001>
module attributes {stable_mosaic.version = 11 : i64} {
  func.func @_dilated_conv_relu_kernel(%arg0: i32, %arg1: i32, %arg2: memref<1x4x16xf32, #tpu.memory_space<vmem>>, %arg3: memref<1x4x16xf32, #tpu.memory_space<vmem>>, %arg4: memref<1x4x16xf32, #tpu.memory_space<vmem>>, %arg5: memref<3x8x4xf32, #tpu.memory_space<vmem>>, %arg6: memref<8x1xf32, #tpu.memory_space<vmem>>, %arg7: memref<1x8x16xf32, #tpu.memory_space<vmem>>) attributes {dimension_semantics = [#tpu.dimension_semantics<parallel>, #tpu.dimension_semantics<parallel>], iteration_bounds = array<i64: 2, 1>, scalar_prefetch = 0 : i64, scratch_operands = 0 : i64, tpu.core_type = #tpu.core_type<tc>, window_params = [{transform_indices = @transform_0, window_bounds = array<i64: 1, 4, 16>}, {transform_indices = @transform_1, window_bounds = array<i64: 1, 4, 16>}, {transform_indices = @transform_2, window_bounds = array<i64: 1, 4, 16>}, {pipeline_mode = #tpu.pipeline_mode<synchronous>, transform_indices = @transform_3, window_bounds = array<i64: 3, 8, 4>}, {pipeline_mode = #tpu.pipeline_mode<synchronous>, transform_indices = @transform_4, window_bounds = array<i64: 8, 1>}, {transform_indices = @transform_5, window_bounds = array<i64: 1, 8, 16>}]} {
    %c0 = arith.constant 0 : index
    %c0_0 = arith.constant 0 : index
    %c0_1 = arith.constant 0 : index
    %0 = vector.load %arg2[%c0, %c0_0, %c0_1] : memref<1x4x16xf32, #tpu.memory_space<vmem>>, vector<1x4x16xf32>
    %1 = vector.shape_cast %0 : vector<1x4x16xf32> to vector<4x16xf32>
    %c0_2 = arith.constant 0 : index
    %c0_3 = arith.constant 0 : index
    %c0_4 = arith.constant 0 : index
    %2 = vector.load %arg3[%c0_2, %c0_3, %c0_4] : memref<1x4x16xf32, #tpu.memory_space<vmem>>, vector<1x4x16xf32>
    %3 = vector.shape_cast %2 : vector<1x4x16xf32> to vector<4x16xf32>
    %c0_5 = arith.constant 0 : index
    %c0_6 = arith.constant 0 : index
    %c0_7 = arith.constant 0 : index
    %4 = vector.load %arg4[%c0_5, %c0_6, %c0_7] : memref<1x4x16xf32, #tpu.memory_space<vmem>>, vector<1x4x16xf32>
    %5 = vector.shape_cast %4 : vector<1x4x16xf32> to vector<4x16xf32>
    %cst = arith.constant 0.000000e+00 : f32
    %6 = vector.broadcast %cst : f32 to vector<4x16xf32>
    %7 = tpu.iota {dimensions = array<i32: 1>} : vector<4x16xi32>
    %c2_i32 = arith.constant 2 : i32
    %8 = tpu.dynamic_rotate %1 by %c2_i32 dim 1 : vector<4x16xf32>, i32 -> vector<4x16xf32>
    %c2_i32_8 = arith.constant 2 : i32
    %9 = tpu.dynamic_rotate %3 by %c2_i32_8 dim 1 : vector<4x16xf32>, i32 -> vector<4x16xf32>
    %c0_i32 = arith.constant 0 : i32
    %10 = arith.cmpi sgt, %arg1, %c0_i32 : i32
    %11 = arith.select %10, %9, %6 : vector<4x16xf32>
    %c2_i32_9 = arith.constant 2 : i32
    %12 = vector.broadcast %c2_i32_9 : i32 to vector<4x16xi32>
    %13 = arith.cmpi slt, %7, %12 : vector<4x16xi32>
    %14 = arith.select %13, %11, %8 : vector<4x16xi1>, vector<4x16xf32>
    %c14_i32 = arith.constant 14 : i32
    %15 = tpu.dynamic_rotate %1 by %c14_i32 dim 1 : vector<4x16xf32>, i32 -> vector<4x16xf32>
    %c14_i32_10 = arith.constant 14 : i32
    %16 = tpu.dynamic_rotate %5 by %c14_i32_10 dim 1 : vector<4x16xf32>, i32 -> vector<4x16xf32>
    %c1_i32 = arith.constant 1 : i32
    %17 = arith.addi %arg1, %c1_i32 : i32
    %c1_i32_11 = arith.constant 1 : i32
    %18 = arith.cmpi slt, %17, %c1_i32_11 : i32
    %19 = arith.select %18, %16, %6 : vector<4x16xf32>
    %c14_i32_12 = arith.constant 14 : i32
    %20 = vector.broadcast %c14_i32_12 : i32 to vector<4x16xi32>
    %21 = arith.cmpi sge, %7, %20 : vector<4x16xi32>
    %22 = arith.select %21, %19, %15 : vector<4x16xi1>, vector<4x16xf32>
    %c0_13 = arith.constant 0 : index
    %c0_14 = arith.constant 0 : index
    %c0_15 = arith.constant 0 : index
    %23 = vector.load %arg5[%c0_13, %c0_14, %c0_15] : memref<3x8x4xf32, #tpu.memory_space<vmem>>, vector<1x8x4xf32>
    %24 = vector.shape_cast %23 : vector<1x8x4xf32> to vector<8x4xf32>
    %cst_16 = arith.constant dense<0.000000e+00> : vector<8x16xf32>
    %25 = tpu.matmul %24, %14, %cst_16 {dimension_numbers = #tpu.dot_dimension_numbers<[1], [0], [0], [1], [0, 0, 1, 1], [], []>} : vector<8x4xf32>, vector<4x16xf32>, vector<8x16xf32> -> vector<8x16xf32>
    %c1 = arith.constant 1 : index
    %c0_17 = arith.constant 0 : index
    %c0_18 = arith.constant 0 : index
    %26 = vector.load %arg5[%c1, %c0_17, %c0_18] : memref<3x8x4xf32, #tpu.memory_space<vmem>>, vector<1x8x4xf32>
    %27 = vector.shape_cast %26 : vector<1x8x4xf32> to vector<8x4xf32>
    %cst_19 = arith.constant dense<0.000000e+00> : vector<8x16xf32>
    %28 = tpu.matmul %27, %1, %cst_19 {dimension_numbers = #tpu.dot_dimension_numbers<[1], [0], [0], [1], [0, 0, 1, 1], [], []>} : vector<8x4xf32>, vector<4x16xf32>, vector<8x16xf32> -> vector<8x16xf32>
    %29 = arith.addf %25, %28 : vector<8x16xf32>
    %c2 = arith.constant 2 : index
    %c0_20 = arith.constant 0 : index
    %c0_21 = arith.constant 0 : index
    %30 = vector.load %arg5[%c2, %c0_20, %c0_21] : memref<3x8x4xf32, #tpu.memory_space<vmem>>, vector<1x8x4xf32>
    %31 = vector.shape_cast %30 : vector<1x8x4xf32> to vector<8x4xf32>
    %cst_22 = arith.constant dense<0.000000e+00> : vector<8x16xf32>
    %32 = tpu.matmul %31, %22, %cst_22 {dimension_numbers = #tpu.dot_dimension_numbers<[1], [0], [0], [1], [0, 0, 1, 1], [], []>} : vector<8x4xf32>, vector<4x16xf32>, vector<8x16xf32> -> vector<8x16xf32>
    %33 = arith.addf %29, %32 : vector<8x16xf32>
    %c0_23 = arith.constant 0 : index
    %c0_24 = arith.constant 0 : index
    %34 = vector.load %arg6[%c0_23, %c0_24] : memref<8x1xf32, #tpu.memory_space<vmem>>, vector<8x1xf32>
    %35 = vector.broadcast %34 : vector<8x1xf32> to vector<8x16xf32>
    %36 = arith.addf %33, %35 : vector<8x16xf32>
    %cst_25 = arith.constant 0.000000e+00 : f32
    %37 = vector.broadcast %cst_25 : f32 to vector<8x16xf32>
    %38 = arith.maximumf %36, %37 : vector<8x16xf32>
    %c0_26 = arith.constant 0 : index
    %c0_27 = arith.constant 0 : index
    %c0_28 = arith.constant 0 : index
    %39 = vector.load %arg7[%c0_26, %c0_27, %c0_28] : memref<1x8x16xf32, #tpu.memory_space<vmem>>, vector<1x8x16xf32>
    %40 = vector.shape_cast %39 : vector<1x8x16xf32> to vector<8x16xf32>
    %41 = vector.shape_cast %38 : vector<8x16xf32> to vector<1x8x16xf32>
    tpu.vector_store %arg7[%c0_26, %c0_27, %c0_28], %41 {strides = array<i32>} : memref<1x8x16xf32, #tpu.memory_space<vmem>>, vector<1x8x16xf32>,
    return
  }
  func.func @transform_0(%arg0: i32, %arg1: i32) -> (i32, i32, i32) {
    %c0_i32 = arith.constant 0 : i32
    %c0_i32_0 = arith.constant 0 : i32
    return %arg0, %c0_i32, %arg1 : i32, i32, i32
  }
  func.func @transform_1(%arg0: i32, %arg1: i32) -> (i32, i32, i32) {
    %c1_i32 = arith.constant 1 : i32
    %0 = arith.muli %arg1, %c1_i32 : i32
    %c1_i32_0 = arith.constant 1 : i32
    %1 = arith.subi %0, %c1_i32_0 : i32
    %c0_i32 = arith.constant 0 : i32
    %2 = arith.maxsi %1, %c0_i32 : i32
    %c0_i32_1 = arith.constant 0 : i32
    %c0_i32_2 = arith.constant 0 : i32
    return %arg0, %c0_i32_1, %2 : i32, i32, i32
  }
  func.func @transform_2(%arg0: i32, %arg1: i32) -> (i32, i32, i32) {
    %c1_i32 = arith.constant 1 : i32
    %0 = arith.addi %arg1, %c1_i32 : i32
    %c1_i32_0 = arith.constant 1 : i32
    %1 = arith.muli %0, %c1_i32_0 : i32
    %c0_i32 = arith.constant 0 : i32
    %2 = arith.minsi %1, %c0_i32 : i32
    %c0_i32_1 = arith.constant 0 : i32
    %c0_i32_2 = arith.constant 0 : i32
    return %arg0, %c0_i32_1, %2 : i32, i32, i32
  }
  func.func @transform_3(%arg0: i32, %arg1: i32) -> (i32, i32, i32) {
    %c0_i32 = arith.constant 0 : i32
    %c0_i32_0 = arith.constant 0 : i32
    %c0_i32_1 = arith.constant 0 : i32
    %c0_i32_2 = arith.constant 0 : i32
    return %c0_i32, %c0_i32_0, %c0_i32_1 : i32, i32, i32
  }
  func.func @transform_4(%arg0: i32, %arg1: i32) -> (i32, i32) {
    %c0_i32 = arith.constant 0 : i32
    %c0_i32_0 = arith.constant 0 : i32
    %c0_i32_1 = arith.constant 0 : i32
    return %c0_i32, %c0_i32_0 : i32, i32
  }
  func.func @transform_5(%arg0: i32, %arg1: i32) -> (i32, i32, i32) {
    %c0_i32 = arith.constant 0 : i32
    %c0_i32_0 = arith.constant 0 : i32
    return %arg0, %c0_i32, %arg1 : i32, i32, i32
  }
}

</mosaic_0001>

<llo_original>
// kernel: tpu_custom_call.1
$region0: #{tpu_custom_call.1}
  #allocation0 [shape = 'u32[]', space=smem, size = 0x4, offset = 0x4, fixed_abs, tag = 'smem constant byte address 0x4 - core index']
  #allocation1 [shape = 'u32[144,128]{1,0:T(1,128)}', space=vmem, size = 0x12000, scoped, tag = 'internal scratch']
  %s0 = inlined_call_operand.vmem [shape: f32[2,4,16], index: 0, kind: input, shape index: {}]
  %s1 = inlined_call_operand.vmem [shape: f32[2,4,16], index: 1, kind: input, shape index: {}]
  %s2 = inlined_call_operand.vmem [shape: f32[2,4,16], index: 2, kind: input, shape index: {}]
  %s3 = inlined_call_operand.vmem [shape: f32[3,8,4], index: 3, kind: input, shape index: {}]
  %s4 = inlined_call_operand.vmem [shape: f32[8,1], index: 4, kind: input, shape index: {}]
  %s5 = inlined_call_operand.hbm [shape: f32[2,8,16], index: 5, kind: output, shape index: {}]
  %s6 = sld [smem:[#allocation0]]
  $region53: #{tpu_custom_call.1} parent=0
    _
  %s8 = ssub.s32 1, %s6
  %s9 = scalar_select 0, %s8, %s6
  $region1: #{tpu_custom_call.1} parent=0
    #allocation2 [shape = 'u8[8192]{0}', space=vmem, size = 0x2000, scoped, tag = 'output window, operand 0']
    #allocation3 [shape = 's32[2]{0}', space=sflag, size = 0x8, scoped, tag = 'scoped memory for tpu_custom_call.1']
    %10 = vsyncpa [#allocation3], 0
    %s11 = scalar_lea.sflag [#allocation3], 1
    %12 = vsyncpa %s11, 0
    loop: start=0, step=1, limit=4
    $region2: #{tpu_custom_call.1} parent=1 // loop_pre_header
      _
    $region3: #{tpu_custom_call.1} parent=1 // loop_header
      %s14 = sphi 0, %s18
      %p15 = scmp.ge.s32.totalorder %s14, 4
      %s21 = sphi 0, %s33
      %s22 = sphi 0, %s29
      %s23 = sphi 0, %s21
      %s24 = sphi 0, %s22
      %s25 = sphi 0, %s23
      %s26 = sphi 0, %s24
      %s38 = sphi 0, %s40
      %s41 = sphi 0, %s38
      %s42 = sphi 0, %s41
      %s58 = sphi 0, %s42
      %s72 = sphi 0, %s74
      %s75 = sphi 0, %s72
      %s76 = sphi 0, %s75
      %s92 = sphi 0, %s76
      %s106 = sphi 0, %s108
      %s109 = sphi 0, %s106
      %s110 = sphi 0, %s109
      %s126 = sphi 0, %s110
      %s130 = sphi 0, %s130
      %s132 = sphi 0, %s130
      %s133 = sphi 0, %s132
      %s147 = sphi 0, %s133
      %s151 = sphi 0, %s151
      %s153 = sphi 0, %s151
      %s154 = sphi 0, %s153
      %s168 = sphi 0, %s154
      %s176 = sphi 0, %s178
      %s179 = sphi 0, %s176
      %s180 = sphi 0, %s179
      %s196 = sphi 0, %s180
    $region4: #{tpu_custom_call.1} parent=1 // loop_header_branch
      %17 = sbr.rel (%p15) target = $region8
    $region5: #{tpu_custom_call.1} parent=1 // loop_body
      %s19 = ssub.s32 %s14, 1
      %s20 = ssub.s32 %s14, 2
      %s27 = sadd.s32 1, %s22
      %p28 = scmp.ge.s32.totalorder %s27, 1
      %s29 = scalar_select %p28, 0, %s27
      %s30 = sadd.s32 1, %s21
      %s31 = scalar_select %p28, %s30, %s21
      %p32 = scmp.ge.s32.totalorder %s31, 2
      %s33 = scalar_select %p32, 0, %s31
      %s34 = ssub.s32 %s21, %s33
      %s35 = ssub.s32 %s22, %s29
      %s36 = sor.u32 %s34, %s35
      %p37 = scmp.eq.s32.totalorder %s36, 0
      %s39 = sadd.s32 %s38, 1
      %s40 = scalar_select %p37, %s38, %s39
      %p43 = pneg %p37
      %p44 = scmp.eq.s32.totalorder %s14, 1
      %p45 = por %p43, %p44
      %p46 = scmp.ne.s32.totalorder %s38, %s41
      %p47 = scmp.eq.s32.totalorder %s14, 0
      %p48 = por %p46, %p47
      %p49 = scmp.ne.s32.totalorder %s38, %s41
      %p50 = scmp.eq.s32.totalorder %s19, 1
      %p51 = por %p49, %p50
      %p52 = scmp.ne.s32.totalorder %s41, %s42
      %p53 = scmp.eq.s32.totalorder %s19, 0
      %p54 = por %p52, %p53
      %p55 = scmp.ne.s32.totalorder %s41, %s42
      %p56 = scmp.eq.s32.totalorder %s20, 1
      %p57 = por %p55, %p56
      %p59 = scmp.ne.s32.totalorder %s42, %s58
      %p60 = scmp.eq.s32.totalorder %s20, 0
      %p61 = por %p59, %p60
      %s62 = ssub.s32 %s22, 1
      %p63 = scmp.gt.s32.totalorder %s62, 0
      %s64 = scalar_select %p63, %s62, 0
      %s65 = ssub.s32 %s29, 1
      %p66 = scmp.gt.s32.totalorder %s65, 0
      %s67 = scalar_select %p66, %s65, 0
      %s68 = ssub.s32 %s21, %s33
      %s69 = ssub.s32 %s64, %s67
      %s70 = sor.u32 %s68, %s69
      %p71 = scmp.eq.s32.totalorder %s70, 0
      %s73 = sadd.s32 %s72, 1
      %s74 = scalar_select %p71, %s72, %s73
      %p77 = pneg %p71
      %p78 = scmp.eq.s32.totalorder %s14, 1
      %p79 = por %p77, %p78
      %p80 = scmp.ne.s32.totalorder %s72, %s75
      %p81 = scmp.eq.s32.totalorder %s14, 0
      %p82 = por %p80, %p81
      %p83 = scmp.ne.s32.totalorder %s72, %s75
      %p84 = scmp.eq.s32.totalorder %s19, 1
      %p85 = por %p83, %p84
      %p86 = scmp.ne.s32.totalorder %s75, %s76
      %p87 = scmp.eq.s32.totalorder %s19, 0
      %p88 = por %p86, %p87
      %p89 = scmp.ne.s32.totalorder %s75, %s76
      %p90 = scmp.eq.s32.totalorder %s20, 1
      %p91 = por %p89, %p90
      %p93 = scmp.ne.s32.totalorder %s76, %s92
      %p94 = scmp.eq.s32.totalorder %s20, 0
      %p95 = por %p93, %p94
      %s96 = sadd.s32 %s22, 1
      %p97 = scmp.lt.s32.totalorder %s96, 0
      %s98 = scalar_select %p97, %s96, 0
      %s99 = sadd.s32 %s29, 1
      %p100 = scmp.lt.s32.totalorder %s99, 0
      %s101 = scalar_select %p100, %s99, 0
      %s102 = ssub.s32 %s21, %s33
      %s103 = ssub.s32 %s98, %s101
      %s104 = sor.u32 %s102, %s103
      %p105 = scmp.eq.s32.totalorder %s104, 0
      %s107 = sadd.s32 %s106, 1
      %s108 = scalar_select %p105, %s106, %s107
      %p111 = pneg %p105
      %p112 = scmp.eq.s32.totalorder %s14, 1
      %p113 = por %p111, %p112
      %p114 = scmp.ne.s32.totalorder %s106, %s109
      %p115 = scmp.eq.s32.totalorder %s14, 0
      %p116 = por %p114, %p115
      %p117 = scmp.ne.s32.totalorder %s106, %s109
      %p118 = scmp.eq.s32.totalorder %s19, 1
      %p119 = por %p117, %p118
      %p120 = scmp.ne.s32.totalorder %s109, %s110
      %p121 = scmp.eq.s32.totalorder %s19, 0
      %p122 = por %p120, %p121
      %p123 = scmp.ne.s32.totalorder %s109, %s110
      %p124 = scmp.eq.s32.totalorder %s20, 1
      %p125 = por %p123, %p124
      %p127 = scmp.ne.s32.totalorder %s110, %s126
      %p128 = scmp.eq.s32.totalorder %s20, 0
      %p129 = por %p127, %p128
      %s131 = sadd.s32 %s130, 1
      %p134 = scmp.eq.s32.totalorder %s14, 1
      %p135 = scmp.ne.s32.totalorder %s130, %s132
      %p136 = scmp.eq.s32.totalorder %s14, 0
      %p137 = por %p135, %p136
      %p138 = scmp.ne.s32.totalorder %s130, %s132
      %p139 = scmp.eq.s32.totalorder %s19, 1
      %p140 = por %p138, %p139
      %p141 = scmp.ne.s32.totalorder %s132, %s133
      %p142 = scmp.eq.s32.totalorder %s19, 0
      %p143 = por %p141, %p142
      %p144 = scmp.ne.s32.totalorder %s132, %s133
      %p145 = scmp.eq.s32.totalorder %s20, 1
      %p146 = por %p144, %p145
      %p148 = scmp.ne.s32.totalorder %s133, %s147
      %p149 = scmp.eq.s32.totalorder %s20, 0
      %p150 = por %p148, %p149
      %s152 = sadd.s32 %s151, 1
      %p155 = scmp.eq.s32.totalorder %s14, 1
      %p156 = scmp.ne.s32.totalorder %s151, %s153
      %p157 = scmp.eq.s32.totalorder %s14, 0
      %p158 = por %p156, %p157
      %p159 = scmp.ne.s32.totalorder %s151, %s153
      %p160 = scmp.eq.s32.totalorder %s19, 1
      %p161 = por %p159, %p160
      %p162 = scmp.ne.s32.totalorder %s153, %s154
      %p163 = scmp.eq.s32.totalorder %s19, 0
      %p164 = por %p162, %p163
      %p165 = scmp.ne.s32.totalorder %s153, %s154
      %p166 = scmp.eq.s32.totalorder %s20, 1
      %p167 = por %p165, %p166
      %p169 = scmp.ne.s32.totalorder %s154, %s168
      %p170 = scmp.eq.s32.totalorder %s20, 0
      %p171 = por %p169, %p170
      %s172 = ssub.s32 %s21, %s33
      %s173 = ssub.s32 %s22, %s29
      %s174 = sor.u32 %s172, %s173
      %p175 = scmp.eq.s32.totalorder %s174, 0
      %s177 = sadd.s32 %s176, 1
      %s178 = scalar_select %p175, %s176, %s177
      %p181 = pneg %p175
      %p182 = scmp.eq.s32.totalorder %s14, 1
      %p183 = por %p181, %p182
      %p184 = scmp.ne.s32.totalorder %s176, %s179
      %p185 = scmp.eq.s32.totalorder %s14, 0
      %p186 = por %p184, %p185
      %p187 = scmp.ne.s32.totalorder %s176, %s179
      %p188 = scmp.eq.s32.totalorder %s19, 1
      %p189 = por %p187, %p188
      %p190 = scmp.ne.s32.totalorder %s179, %s180
      %p191 = scmp.eq.s32.totalorder %s19, 0
      %p192 = por %p190, %p191
      %p193 = scmp.ne.s32.totalorder %s179, %s180
      %p194 = scmp.eq.s32.totalorder %s20, 1
      %p195 = por %p193, %p194
      %p197 = scmp.ne.s32.totalorder %s180, %s196
      %p198 = scmp.eq.s32.totalorder %s20, 0
      %p199 = por %p197, %p198
      %p200 = scmp.le.s32.totalorder 1, %s14
      %p201 = scmp.lt.s32.totalorder %s14, 3
      %p202 = pnand %p200, %p201
      %p203 = pneg %p202
      // Predicated region
      $region9: #{tpu_custom_call.1} parent=5 // pred_check
        _
      $region10: #{tpu_custom_call.1} parent=5 // pred_check_branch
        %205 = sbr.rel (%p202) target = $region12
      $region11: #{tpu_custom_call.1} parent=5 // pred_region
        %s206 = ssub.s32 %s14, 1
        // Predicated region
        $region13: #{tpu_custom_call.1} parent=11 // pred_check
          %p207 = pneg %p143
        $region14: #{tpu_custom_call.1} parent=11 // pred_check_branch
          %209 = sbr.rel (%p207) target = $region16
        $region15: #{tpu_custom_call.1} parent=11 // pred_region
          _
        $region16: #{tpu_custom_call.1} parent=11 // pred_fallthru
          _
        // Predicated region
        $region17: #{tpu_custom_call.1} parent=11 // pred_check
          %p210 = pneg %p164
        $region18: #{tpu_custom_call.1} parent=11 // pred_check_branch
          %212 = sbr.rel (%p210) target = $region20
        $region19: #{tpu_custom_call.1} parent=11 // pred_region
          _
        $region20: #{tpu_custom_call.1} parent=11 // pred_fallthru
          _
      $region12: #{tpu_custom_call.1} parent=5 // pred_fallthru
        _
      %p213 = scmp.lt.s32.totalorder %s14, 2
      // Predicated region
      $region21: #{tpu_custom_call.1} parent=5 // pred_check
        %p214 = pneg %p213
      $region22: #{tpu_custom_call.1} parent=5 // pred_check_branch
        %216 = sbr.rel (%p214) target = $region24
      $region23: #{tpu_custom_call.1} parent=5 // pred_region
        // Predicated region
        $region25: #{tpu_custom_call.1} parent=23 // pred_check
          %p217 = pneg %p48
        $region26: #{tpu_custom_call.1} parent=23 // pred_check_branch
          %219 = sbr.rel (%p217) target = $region28
        $region27: #{tpu_custom_call.1} parent=23 // pred_region
          %p220 = scmp.lt.s32.totalorder %s21, 1
          %s221 = scalar_select %p220, %s21, 1
          %p222 = scmp.lt.s32.totalorder %s22, 0
          %s223 = scalar_select %p222, %s22, 0
          %s224 = sadd.s32 %s223, %s221
          %s225 = smul.addr %s224, 4
          %s226 = scalar_lea.vmem %s0, %s225
        $region28: #{tpu_custom_call.1} parent=23 // pred_fallthru
          _
        // Predicated region
        $region29: #{tpu_custom_call.1} parent=23 // pred_check
          %p227 = pneg %p82
        $region30: #{tpu_custom_call.1} parent=23 // pred_check_branch
          %229 = sbr.rel (%p227) target = $region32
        $region31: #{tpu_custom_call.1} parent=23 // pred_region
          %s230 = ssub.s32 %s22, 1
          %p231 = scmp.gt.s32.totalorder %s230, 0
          %s232 = scalar_select %p231, %s230, 0
          %p233 = scmp.lt.s32.totalorder %s21, 1
          %s234 = scalar_select %p233, %s21, 1
          %p235 = scmp.lt.s32.totalorder %s232, 0
          %s236 = scalar_select %p235, %s232, 0
          %s237 = sadd.s32 %s236, %s234
          %s238 = smul.addr %s237, 4
          %s239 = scalar_lea.vmem %s1, %s238
          %s240 = ssub.s32 %s22, 1
          %p241 = scmp.gt.s32.totalorder %s240, 0
          %s242 = scalar_select %p241, %s240, 0
        $region32: #{tpu_custom_call.1} parent=23 // pred_fallthru
          _
        // Predicated region
        $region33: #{tpu_custom_call.1} parent=23 // pred_check
          %p243 = pneg %p116
        $region34: #{tpu_custom_call.1} parent=23 // pred_check_branch
          %245 = sbr.rel (%p243) target = $region36
        $region35: #{tpu_custom_call.1} parent=23 // pred_region
          %s246 = sadd.s32 %s22, 1
          %p247 = scmp.lt.s32.totalorder %s246, 0
          %s248 = scalar_select %p247, %s246, 0
          %p249 = scmp.lt.s32.totalorder %s21, 1
          %s250 = scalar_select %p249, %s21, 1
          %p251 = scmp.lt.s32.totalorder %s248, 0
          %s252 = scalar_select %p251, %s248, 0
          %s253 = sadd.s32 %s252, %s250
          %s254 = smul.addr %s253, 4
          %s255 = scalar_lea.vmem %s2, %s254
          %s256 = sadd.s32 %s22, 1
          %p257 = scmp.lt.s32.totalorder %s256, 0
          %s258 = scalar_select %p257, %s256, 0
        $region36: #{tpu_custom_call.1} parent=23 // pred_fallthru
          _
      $region24: #{tpu_custom_call.1} parent=5 // pred_fallthru
        _
      %p259 = scmp.le.s32.totalorder 1, %s14
      %p260 = scmp.lt.s32.totalorder %s14, 3
      %p261 = pnand %p259, %p260
      %p262 = pneg %p261
      // Predicated region
      $region37: #{tpu_custom_call.1} parent=5 // pred_check
        _
      $region38: #{tpu_custom_call.1} parent=5 // pred_check_branch
        %264 = sbr.rel (%p261) target = $region40
      $region39: #{tpu_custom_call.1} parent=5 // pred_region
        %s265 = ssub.s32 %s14, 1
        %p266 = scmp.lt.s32.totalorder %s23, 1
        %s267 = scalar_select %p266, %s23, 1
        %p268 = scmp.lt.s32.totalorder %s24, 0
        %s269 = scalar_select %p268, %s24, 0
        %s270 = sadd.s32 %s269, %s267
        %s271 = smul.addr %s270, 4
        %s272 = scalar_lea.vmem %s0, %s271
        %p273 = pneg %p54
        %p274 = pneg %p51
        %s275 = ssub.s32 %s24, 1
        %p276 = scmp.gt.s32.totalorder %s275, 0
        %s277 = scalar_select %p276, %s275, 0
        %p278 = scmp.lt.s32.totalorder %s23, 1
        %s279 = scalar_select %p278, %s23, 1
        %p280 = scmp.lt.s32.totalorder %s277, 0
        %s281 = scalar_select %p280, %s277, 0
        %s282 = sadd.s32 %s281, %s279
        %s283 = smul.addr %s282, 4
        %s284 = scalar_lea.vmem %s1, %s283
        %p285 = pneg %p88
        %p286 = pneg %p85
        %s287 = sadd.s32 %s24, 1
        %p288 = scmp.lt.s32.totalorder %s287, 0
        %s289 = scalar_select %p288, %s287, 0
        %p290 = scmp.lt.s32.totalorder %s23, 1
        %s291 = scalar_select %p290, %s23, 1
        %p292 = scmp.lt.s32.totalorder %s289, 0
        %s293 = scalar_select %p292, %s289, 0
        %s294 = sadd.s32 %s293, %s291
        %s295 = smul.addr %s294, 4
        %s296 = scalar_lea.vmem %s2, %s295
        %p297 = pneg %p122
        %p298 = pneg %p119
        %p299 = pneg %p143
        %p300 = pneg %p140
        %p301 = pneg %p164
        %p302 = pneg %p161
        %p303 = pneg %p192
        %p304 = pneg %p189
        %s305 = sand.u32 %s179, 1
        %s306 = scalar_lea.sflag [#allocation3], %s305
        %s307 = sand.u32 %s179, 1
        %s308 = smul.addr %s307, 8
        %s309 = scalar_lea.vmem [#allocation2], %s308
        %p310 = scmp.lt.s32.totalorder %s23, 1
        %s311 = scalar_select %p310, %s23, 1
        %p312 = scmp.lt.s32.totalorder %s24, 0
        %s313 = scalar_select %p312, %s24, 0
        %s314 = sadd.s32 %s313, %s311
        %s315 = smul.addr %s314, 4
        %s316 = scalar_lea.vmem %s0, %s315
        %s317 = ssub.s32 %s24, 1
        %p318 = scmp.gt.s32.totalorder %s317, 0
        %s319 = scalar_select %p318, %s317, 0
        %p320 = scmp.lt.s32.totalorder %s23, 1
        %s321 = scalar_select %p320, %s23, 1
        %p322 = scmp.lt.s32.totalorder %s319, 0
        %s323 = scalar_select %p322, %s319, 0
        %s324 = sadd.s32 %s323, %s321
        %s325 = smul.addr %s324, 4
        %s326 = scalar_lea.vmem %s1, %s325
        %s327 = ssub.s32 %s24, 1
        %p328 = scmp.gt.s32.totalorder %s327, 0
        %s329 = scalar_select %p328, %s327, 0
        %s330 = sadd.s32 %s24, 1
        %p331 = scmp.lt.s32.totalorder %s330, 0
        %s332 = scalar_select %p331, %s330, 0
        %p333 = scmp.lt.s32.totalorder %s23, 1
        %s334 = scalar_select %p333, %s23, 1
        %p335 = scmp.lt.s32.totalorder %s332, 0
        %s336 = scalar_select %p335, %s332, 0
        %s337 = sadd.s32 %s336, %s334
        %s338 = smul.addr %s337, 4
        %s339 = scalar_lea.vmem %s2, %s338
        %s340 = sadd.s32 %s24, 1
        %p341 = scmp.lt.s32.totalorder %s340, 0
        %s342 = scalar_select %p341, %s340, 0
        %v343 = vld [vmem:[%s316] sm:$0xf]
        %v344 = vld [vmem:[%s326] sm:$0xf]
        %v345 = vld [vmem:[%s339] sm:$0xf]
        %v346 = vlaneseq
        %v347 = vand.u32 %v346, 127
        %vm348 = vcmask 1047680
        %349 = vrot.lane.b32.xlu0 %v343, 16
        %v350 = vpop.permute.xlu0 %349
        %v351 = vsel %vm348, %v350, %v343
        %352 = vrot.lane.b32.xlu0 %v351, 16
        %v353 = vpop.permute.xlu0 %352
        %v354 = vsel %vm348, %v353, %v343
        %355 = vrot.lane.b32.xlu0 %v344, 16
        %v356 = vpop.permute.xlu0 %355
        %v357 = vsel %vm348, %v356, %v344
        %358 = vrot.lane.b32.xlu0 %v357, 16
        %v359 = vpop.permute.xlu0 %358
        %v360 = vsel %vm348, %v359, %v344
        %p361 = scmp.gt.s32.totalorder %s24, 0
        %s362 = scalar_select %p361, 1, 0
        %v363 = vstv %s362
        %vm364 = vcmp.eq.s32.totalorder %v363, 1
        %v365 = vsel %vm364, %v360, 0.0
        %vm366 = vcmp.lt.s32.totalorder %v347, 2
        %368 = vrot.lane.b32.xlu0 %v365, 114
        %v369 = vpop.permute.xlu0 %368
        %372 = vrot.lane.b32.xlu0 %v354, 114
        %v373 = vpop.permute.xlu0 %372
        %v375 = vsel %vm366, %v369, %v373
        %376 = vrot.lane.b32.xlu0 %v345, 16
        %v377 = vpop.permute.xlu0 %376
        %v378 = vsel %vm348, %v377, %v345
        %379 = vrot.lane.b32.xlu0 %v378, 16
        %v380 = vpop.permute.xlu0 %379
        %v381 = vsel %vm348, %v380, %v345
        %s382 = sadd.s32 %s24, 1
        %p383 = scmp.lt.s32.totalorder %s382, 1
        %s384 = scalar_select %p383, 1, 0
        %v385 = vstv %s384
        %vm386 = vcmp.eq.s32.totalorder %v385, 1
        %v387 = vsel %vm386, %v381, 0.0
        %vm388 = vcmp.ge.s32.totalorder %v347, 14
        %390 = vrot.lane.b32.xlu0 %v387, 126
        %v391 = vpop.permute.xlu0 %390
        %393 = vrot.lane.b32.xlu0 %v354, 126
        %v394 = vpop.permute.xlu0 %393
        %v396 = vsel %vm388, %v391, %v394
        %v397 = vld [vmem:[%s3] sm:$0xff]
        %s398 = scalar_lea.vmem %s3, 8
        %v399 = vld [vmem:[%s398] sm:$0xff]
        %vm400 = vcmask 31744
        %v402 = vsel %vm400, %v399, 0
        %vm404 = vcmask 1043456
        %v406 = vsel %vm404, %v343, 0
        %408 = vmatprep.subr.mxu0 0.0
        %409 = vmatpush1.msra.mxu0 0.0
        %410 = vmatprep.subr.mxu0 0.0
        %411 = vmatpush1.msra.mxu0 0.0
        %412 = vmatprep.subr.mxu0 0.0
        %413 = vmatpush1.msra.mxu0 0.0
        %414 = vmatprep.subr.mxu0 0.0
        %415 = vmatpush1.msra.mxu0 0.0
        %416 = vmatprep.subr.mxu0 0.0
        %417 = vmatpush1.msra.mxu0 0.0
        %418 = vmatprep.subr.mxu0 0.0
        %419 = vmatpush1.msra.mxu0 0.0
        %420 = vmatprep.subr.mxu0 0.0
        %421 = vmatpush1.msra.mxu0 0.0
        %422 = vmatprep.subr.mxu0 0.0
        %423 = vmatpush1.msra.mxu0 0.0
        %424 = vmatprep.subr.mxu0 0.0
        %425 = vmatpush1.msra.mxu0 0.0
        %426 = vmatprep.subr.mxu0 0.0
        %427 = vmatpush1.msra.mxu0 0.0
        %428 = vmatprep.subr.mxu0 0.0
        %429 = vmatpush1.msra.mxu0 0.0
        %430 = vmatprep.subr.mxu0 0.0
        %431 = vmatpush1.msra.mxu0 0.0
        %432 = vmatprep.subr.mxu0 0.0
        %433 = vmatpush1.msra.mxu0 0.0
        %434 = vmatprep.subr.mxu0 0.0
        %435 = vmatpush1.msra.mxu0 0.0
        %436 = vmatprep.subr.mxu0 0.0
        %437 = vmatpush1.msra.mxu0 0.0
        %438 = vmatprep.subr.mxu0 0.0
        %439 = vmatpush1.msra.mxu0 %v406
        %440 = vmatprep.subr.mxu0 0.0
        %441 = vmatpush2.msra.mxu0 0.0
        %442 = vmatprep.subr.mxu0 0.0
        %443 = vmatpush2.msra.mxu0 0.0
        %444 = vmatprep.subr.mxu0 0.0
        %445 = vmatpush2.msra.mxu0 0.0
        %446 = vmatprep.subr.mxu0 0.0
        %447 = vmatpush2.msra.mxu0 0.0
        %448 = vmatprep.subr.mxu0 0.0
        %449 = vmatpush2.msra.mxu0 0.0
        %450 = vmatprep.subr.mxu0 0.0
        %451 = vmatpush2.msra.mxu0 0.0
        %452 = vmatprep.subr.mxu0 0.0
        %453 = vmatpush2.msra.mxu0 0.0
        %454 = vmatprep.subr.mxu0 0.0
        %455 = vmatpush2.msra.mxu0 0.0
        %456 = vmatprep.subr.mxu0 0.0
        %457 = vmatpush2.msra.mxu0 0.0
        %458 = vmatprep.subr.mxu0 0.0
        %459 = vmatpush2.msra.mxu0 0.0
        %460 = vmatprep.subr.mxu0 0.0
        %461 = vmatpush2.msra.mxu0 0.0
        %462 = vmatprep.subr.mxu0 0.0
        %463 = vmatpush2.msra.mxu0 0.0
        %464 = vmatprep.subr.mxu0 0.0
        %465 = vmatpush2.msra.mxu0 0.0
        %466 = vmatprep.subr.mxu0 0.0
        %467 = vmatpush2.msra.mxu0 0.0
        %468 = vmatprep.subr.mxu0 0.0
        %469 = vmatpush2.msra.mxu0 0.0
        %470 = vmatprep.subr.mxu0 0.0
        %471 = vmatpush2.msra.mxu0 0.0
        %472 = vmatprep.mubr.f32.mxu0 0.0
        %473 = vmatmul.mubr.f32.gmra.mxu0 %v402
        %v474 = vpop.f32.mrf.mxu0
        %v475 = vadd.f32 0.0, %v474
        %v476 = vpop.f32.mrf.mxu0
        %477 = vdwg.mxu0
        %v479 = vsel %vm400, %v397, 0
        %v482 = vsel %vm404, %v375, 0
        %484 = vmatprep.subr.mxu0 0.0
        %485 = vmatpush1.msra.mxu0 0.0
        %486 = vmatprep.subr.mxu0 0.0
        %487 = vmatpush1.msra.mxu0 0.0
        %488 = vmatprep.subr.mxu0 0.0
        %489 = vmatpush1.msra.mxu0 0.0
        %490 = vmatprep.subr.mxu0 0.0
        %491 = vmatpush1.msra.mxu0 0.0
        %492 = vmatprep.subr.mxu0 0.0
        %493 = vmatpush1.msra.mxu0 0.0
        %494 = vmatprep.subr.mxu0 0.0
        %495 = vmatpush1.msra.mxu0 0.0
        %496 = vmatprep.subr.mxu0 0.0
        %497 = vmatpush1.msra.mxu0 0.0
        %498 = vmatprep.subr.mxu0 0.0
        %499 = vmatpush1.msra.mxu0 0.0
        %500 = vmatprep.subr.mxu0 0.0
        %501 = vmatpush1.msra.mxu0 0.0
        %502 = vmatprep.subr.mxu0 0.0
        %503 = vmatpush1.msra.mxu0 0.0
        %504 = vmatprep.subr.mxu0 0.0
        %505 = vmatpush1.msra.mxu0 0.0
        %506 = vmatprep.subr.mxu0 0.0
        %507 = vmatpush1.msra.mxu0 0.0
        %508 = vmatprep.subr.mxu0 0.0
        %509 = vmatpush1.msra.mxu0 0.0
        %510 = vmatprep.subr.mxu0 0.0
        %511 = vmatpush1.msra.mxu0 0.0
        %512 = vmatprep.subr.mxu0 0.0
        %513 = vmatpush1.msra.mxu0 0.0
        %514 = vmatprep.subr.mxu0 0.0
        %515 = vmatpush1.msra.mxu0 %v482
        %516 = vmatprep.subr.mxu0 0.0
        %517 = vmatpush2.msra.mxu0 0.0
        %518 = vmatprep.subr.mxu0 0.0
        %519 = vmatpush2.msra.mxu0 0.0
        %520 = vmatprep.subr.mxu0 0.0
        %521 = vmatpush2.msra.mxu0 0.0
        %522 = vmatprep.subr.mxu0 0.0
        %523 = vmatpush2.msra.mxu0 0.0
        %524 = vmatprep.subr.mxu0 0.0
        %525 = vmatpush2.msra.mxu0 0.0
        %526 = vmatprep.subr.mxu0 0.0
        %527 = vmatpush2.msra.mxu0 0.0
        %528 = vmatprep.subr.mxu0 0.0
        %529 = vmatpush2.msra.mxu0 0.0
        %530 = vmatprep.subr.mxu0 0.0
        %531 = vmatpush2.msra.mxu0 0.0
        %532 = vmatprep.subr.mxu0 0.0
        %533 = vmatpush2.msra.mxu0 0.0
        %534 = vmatprep.subr.mxu0 0.0
        %535 = vmatpush2.msra.mxu0 0.0
        %536 = vmatprep.subr.mxu0 0.0
        %537 = vmatpush2.msra.mxu0 0.0
        %538 = vmatprep.subr.mxu0 0.0
        %539 = vmatpush2.msra.mxu0 0.0
        %540 = vmatprep.subr.mxu0 0.0
        %541 = vmatpush2.msra.mxu0 0.0
        %542 = vmatprep.subr.mxu0 0.0
        %543 = vmatpush2.msra.mxu0 0.0
        %544 = vmatprep.subr.mxu0 0.0
        %545 = vmatpush2.msra.mxu0 0.0
        %546 = vmatprep.subr.mxu0 0.0
        %547 = vmatpush2.msra.mxu0 0.0
        %548 = vmatprep.mubr.f32.mxu0 0.0
        %549 = vmatmul.mubr.f32.gmra.mxu0 %v479
        %v550 = vpop.f32.mrf.mxu0
        %v551 = vadd.f32 %v475, %v550
        %v552 = vpop.f32.mrf.mxu0
        %553 = vdwg.mxu0
        %s554 = scalar_lea.vmem %s3, 16
        %v555 = vld [vmem:[%s554] sm:$0xff]
        %v557 = vsel %vm400, %v555, 0
        %v560 = vsel %vm404, %v396, 0
        %562 = vmatprep.subr.mxu0 0.0
        %563 = vmatpush1.msra.mxu0 0.0
        %564 = vmatprep.subr.mxu0 0.0
        %565 = vmatpush1.msra.mxu0 0.0
        %566 = vmatprep.subr.mxu0 0.0
        %567 = vmatpush1.msra.mxu0 0.0
        %568 = vmatprep.subr.mxu0 0.0
        %569 = vmatpush1.msra.mxu0 0.0
        %570 = vmatprep.subr.mxu0 0.0
        %571 = vmatpush1.msra.mxu0 0.0
        %572 = vmatprep.subr.mxu0 0.0
        %573 = vmatpush1.msra.mxu0 0.0
        %574 = vmatprep.subr.mxu0 0.0
        %575 = vmatpush1.msra.mxu0 0.0
        %576 = vmatprep.subr.mxu0 0.0
        %577 = vmatpush1.msra.mxu0 0.0
        %578 = vmatprep.subr.mxu0 0.0
        %579 = vmatpush1.msra.mxu0 0.0
        %580 = vmatprep.subr.mxu0 0.0
        %581 = vmatpush1.msra.mxu0 0.0
        %582 = vmatprep.subr.mxu0 0.0
        %583 = vmatpush1.msra.mxu0 0.0
        %584 = vmatprep.subr.mxu0 0.0
        %585 = vmatpush1.msra.mxu0 0.0
        %586 = vmatprep.subr.mxu0 0.0
        %587 = vmatpush1.msra.mxu0 0.0
        %588 = vmatprep.subr.mxu0 0.0
        %589 = vmatpush1.msra.mxu0 0.0
        %590 = vmatprep.subr.mxu0 0.0
        %591 = vmatpush1.msra.mxu0 0.0
        %592 = vmatprep.subr.mxu0 0.0
        %593 = vmatpush1.msra.mxu0 %v560
        %594 = vmatprep.subr.mxu0 0.0
        %595 = vmatpush2.msra.mxu0 0.0
        %596 = vmatprep.subr.mxu0 0.0
        %597 = vmatpush2.msra.mxu0 0.0
        %598 = vmatprep.subr.mxu0 0.0
        %599 = vmatpush2.msra.mxu0 0.0
        %600 = vmatprep.subr.mxu0 0.0
        %601 = vmatpush2.msra.mxu0 0.0
        %602 = vmatprep.subr.mxu0 0.0
        %603 = vmatpush2.msra.mxu0 0.0
        %604 = vmatprep.subr.mxu0 0.0
        %605 = vmatpush2.msra.mxu0 0.0
        %606 = vmatprep.subr.mxu0 0.0
        %607 = vmatpush2.msra.mxu0 0.0
        %608 = vmatprep.subr.mxu0 0.0
        %609 = vmatpush2.msra.mxu0 0.0
        %610 = vmatprep.subr.mxu0 0.0
        %611 = vmatpush2.msra.mxu0 0.0
        %612 = vmatprep.subr.mxu0 0.0
        %613 = vmatpush2.msra.mxu0 0.0
        %614 = vmatprep.subr.mxu0 0.0
        %615 = vmatpush2.msra.mxu0 0.0
        %616 = vmatprep.subr.mxu0 0.0
        %617 = vmatpush2.msra.mxu0 0.0
        %618 = vmatprep.subr.mxu0 0.0
        %619 = vmatpush2.msra.mxu0 0.0
        %620 = vmatprep.subr.mxu0 0.0
        %621 = vmatpush2.msra.mxu0 0.0
        %622 = vmatprep.subr.mxu0 0.0
        %623 = vmatpush2.msra.mxu0 0.0
        %624 = vmatprep.subr.mxu0 0.0
        %625 = vmatpush2.msra.mxu0 0.0
        %626 = vmatprep.mubr.f32.mxu0 0.0
        %627 = vmatmul.mubr.f32.gmra.mxu0 %v557
        %v628 = vpop.f32.mrf.mxu0
        %v629 = vadd.f32 0.0, %v628
        %v630 = vpop.f32.mrf.mxu0
        %631 = vdwg.mxu0
        %v632 = vadd.f32 %v551, %v629
        %v633 = vld [vmem:[%s4] sm:$0xff]
        %635 = vset.pattern.permute.xlu0 0
        %636 = vperm.xlu0 %635, %v633
        %v637 = vpop.permute.xlu0 %636
        %v639 = vadd.f32 %v632, %v637
        %v640 = vmax.f32 %v639, 0.0
        %vm641 = vcmask 130048
        %642 = vst.msk [vmem:[%s309] sm:$0xff] %vm641, %v640
        %s643 = sand.u32 %s179, 1
        %s644 = scalar_lea.sflag [#allocation3], %s643
        %s645 = sand.u32 %s179, 1
        %s646 = smul.addr %s645, 8
        %s647 = scalar_lea.vmem [#allocation2], %s646
        // Predicated region
        $region41: #{tpu_custom_call.1} parent=39 // pred_check
          %p648 = pneg %p189
        $region42: #{tpu_custom_call.1} parent=39 // pred_check_branch
          %650 = sbr.rel (%p648) target = $region44
        $region43: #{tpu_custom_call.1} parent=39 // pred_region
          %s652 = ssub.s32 128, 128
          %653 = vsyncadd %s644, %s652
          %s654 = sadd.s32 %s24, %s23
          %s655 = smul.addr %s654, 128
          %s656 = scalar_lea.hbm %s5, %s655
          %s658 = sshll.u32 %s647, 4
          %s659 = int_to_ptr.vmem [resolvable:$true] %s658
          %661 = dma.vmem_to_hbm [thread:$0]  %s659, 128, %s656, %s644
        $region44: #{tpu_custom_call.1} parent=39 // pred_fallthru
          _
      $region40: #{tpu_custom_call.1} parent=5 // pred_fallthru
        _
      %p662 = scmp.le.s32.totalorder 2, %s14
      // Predicated region
      $region45: #{tpu_custom_call.1} parent=5 // pred_check
        %p663 = pneg %p662
      $region46: #{tpu_custom_call.1} parent=5 // pred_check_branch
        %665 = sbr.rel (%p663) target = $region48
      $region47: #{tpu_custom_call.1} parent=5 // pred_region
        %s666 = ssub.s32 %s14, 2
        // Predicated region
        $region49: #{tpu_custom_call.1} parent=47 // pred_check
          %p667 = pneg %p195
        $region50: #{tpu_custom_call.1} parent=47 // pred_check_branch
          %669 = sbr.rel (%p667) target = $region52
        $region51: #{tpu_custom_call.1} parent=47 // pred_region
          %s670 = sand.u32 %s180, 1
          %s671 = scalar_lea.sflag [#allocation3], %s670
          %s672 = sand.u32 %s180, 1
          %s673 = smul.addr %s672, 8
          %s674 = scalar_lea.vmem [#allocation2], %s673
          %675 = dma.done %s671, 128
        $region52: #{tpu_custom_call.1} parent=47 // pred_fallthru
          _
      $region48: #{tpu_custom_call.1} parent=5 // pred_fallthru
        _
    $region6: #{tpu_custom_call.1} parent=1 // loop_footer
      %s18 = sadd.s32 1, %s14
    $region7: #{tpu_custom_call.1} parent=1 // loop_footer_branch
      %13 = sbr.rel target = $region3
    $region8: #{tpu_custom_call.1} parent=1 // loop_exit
      _
    %676 = vsyncpa [#allocation3], 1
    %s677 = scalar_lea.sflag [#allocation3], 1
    %678 = vsyncpa %s677, 1

</llo_original>
